<compile_context>
chip_gen: v6e
topology: v6e:2x2x1
jax: 0.10.0
libtpu: 0.0.40
codegen_flags: <defaults>
</compile_context>

<pallas_src>
import functools

import jax
import jax.numpy as jnp
from jax.experimental import pallas as pl
from jax.experimental.pallas import tpu as pltpu

LN_EPS = 1e-5


# ---------------------------------- Pallas kernel ----------------------------

def cnn_classifier_kernel(x_ref, w1_ref, w2_ref, fcw_ref, vec_ref, out_ref, *,
                          L):
    # x_ref: (N, Cin) with N = TB * L (batch fused into the matmul M dim).
    N, Cin = x_ref.shape
    Cmid = w1_ref.shape[2]
    TB, NC_pad = out_ref.shape

    # Sequence-boundary masks from two iota compares (no DMA'd mask inputs).
    pos = jax.lax.broadcasted_iota(jnp.int32, (N, 1), 0) % L
    not_first = pos != 0          # False on the first row of each sequence
    not_last = pos != (L - 1)     # False on the last  row of each sequence

    # Packed per-channel vectors: one (8, 128) operand instead of 7 tiny ones.
    ln1_w = vec_ref[0:1, :Cin]
    ln1_b = vec_ref[1:2, :Cin]
    ln2_w = vec_ref[2:3, :Cmid]
    ln2_b = vec_ref[3:4, :Cmid]
    b1 = vec_ref[4:5, :Cmid]
    b2 = vec_ref[5:6, :Cmid]
    fcb = vec_ref[6:7, :NC_pad]

    def layernorm(h, w, b):
        # f32 statistics (biased variance, matching nn.LayerNorm).
        mu = jnp.mean(h, axis=-1, keepdims=True)
        var = jnp.mean((h - mu) ** 2, axis=-1, keepdims=True)
        return (h - mu) * jax.lax.rsqrt(var + LN_EPS) * w + b

    def conv1d_k3(h, w_ref, bias):
        # y[l] = h[l-1] @ W0 + h[l] @ W1 + h[l+1] @ W2 + b (zero pad at seq
        # boundaries), as three accumulated MXU dots (no 3*C im2col concat).
        h_prev = jnp.where(not_first, pltpu.roll(h, 1, 0), 0.0)
        h_next = jnp.where(not_last, pltpu.roll(h, N - 1, 0), 0.0)
        y = jnp.dot(h_prev.astype(jnp.bfloat16), w_ref[0],
                    preferred_element_type=jnp.float32)
        y = y + jnp.dot(h.astype(jnp.bfloat16), w_ref[1],
                        preferred_element_type=jnp.float32)
        y = y + jnp.dot(h_next.astype(jnp.bfloat16), w_ref[2],
                        preferred_element_type=jnp.float32)
        return y + bias

    h = layernorm(x_ref[...], ln1_w, ln1_b)        # bn1 (f32)
    h = jnp.maximum(h, 0.0)                        # relu
    h = conv1d_k3(h, w1_ref, b1)                   # conv1
    h = layernorm(h, ln2_w, ln2_b)                 # bn2
    h = jnp.maximum(h, 0.0)                        # relu
    h = conv1d_k3(h, w2_ref, b2)                   # conv2 -> (N, Cmid) f32

    # Exact per-sequence mean pool in f32 (sublane reduction; no bf16 pooling
    # matrix), then f32 FC, then a single lane-dense (128-padded) store.
    pooled = jnp.mean(h.reshape(TB, L, Cmid), axis=1)          # (TB, Cmid)
    logits = jnp.dot(pooled, fcw_ref[...],
                     preferred_element_type=jnp.float32) + fcb
    out_ref[...] = logits


# ---------------------------------- wrapper -----------------------------------

def _batch_tiling(B, L, target_rows):
    # Small batches: one full block (block dims == array dims, so the (8,128)
    # divisibility rule is trivially satisfied).
    if B < 16:
        return B, B
    tb = max(8, (target_rows // max(L, 1)) // 8 * 8)        # rows-per-step goal
    tb = min(tb, max(8, (8192 // max(L, 1)) // 8 * 8))      # VMEM guard
    tb = min(tb, max(8, (B // 2) // 8 * 8))                 # >=2 grid steps
    b_pad = -(-B // tb) * tb
    return tb, b_pad


@functools.partial(jax.jit, static_argnames=("target_rows",))
def cnn_classifier_forward(x, params, *, target_rows=2048):
    B, L, Cin = x.shape
    Cmid = params["conv2_b"].shape[-1]
    NC = params["fc_b"].shape[-1]

    TB, B_pad = _batch_tiling(B, L, target_rows)
    grid = (B_pad // TB,)
    N = TB * L                                    # rows per block

    if B_pad != B:
        # Edge-replicate padded batch rows -> well-conditioned LayerNorm stats.
        x = jnp.pad(x, ((0, B_pad - B), (0, 0), (0, 0)), mode="edge")
    x2 = x.reshape(B_pad * L, Cin)                # fused (rows, channels) slab

    # bf16 conv weights, kept as three (C, Cmid) taps: (3, Cin/Cmid, Cmid).
    w1 = params["conv1_w"].astype(jnp.bfloat16)
    w2 = params["conv2_w"].astype(jnp.bfloat16)

    # FC stays f32 (tiny); classes padded to a 128-lane-dense output store.
    NC_pad = ((NC + 127) // 128) * 128
    fcw = jnp.zeros((Cmid, NC_pad), jnp.float32).at[:, :NC].set(params["fc_w"])

    # Pack all per-channel vectors into one (8, Cvec) f32 operand.
    Cvec = max(128, ((max(Cin, Cmid, NC_pad) + 127) // 128) * 128)
    vecs = jnp.zeros((8, Cvec), jnp.float32)
    vecs = vecs.at[0, :Cin].set(params["ln1_w"].reshape(-1))
    vecs = vecs.at[1, :Cin].set(params["ln1_b"].reshape(-1))
    vecs = vecs.at[2, :Cmid].set(params["ln2_w"].reshape(-1))
    vecs = vecs.at[3, :Cmid].set(params["ln2_b"].reshape(-1))
    vecs = vecs.at[4, :Cmid].set(params["conv1_b"].reshape(-1))
    vecs = vecs.at[5, :Cmid].set(params["conv2_b"].reshape(-1))
    vecs = vecs.at[6, :NC].set(params["fc_b"].reshape(-1))

    def const_spec(a):
        return pl.BlockSpec(a.shape, lambda i: (0,) * a.ndim)

    out = pl.pallas_call(
        functools.partial(cnn_classifier_kernel, L=L),
        out_shape=jax.ShapeDtypeStruct((B_pad, NC_pad), jnp.float32),
        grid=grid,
        in_specs=[pl.BlockSpec((N, Cin), lambda i: (i, 0)),
                  const_spec(w1), const_spec(w2), const_spec(fcw),
                  const_spec(vecs)],
        out_specs=pl.BlockSpec((TB, NC_pad), lambda i: (i, 0)),
        compiler_params=pltpu.CompilerParams(
            dimension_semantics=("parallel",),
            vmem_limit_bytes=32 * 1024 * 1024),
    )(x2, w1, w2, fcw, vecs)
    return out[:B, :NC]


# ------------------------------ params / reference ---------------------------

def init_params(key, in_planes, mid_planes, num_classes):
    ks = jax.random.split(key, 10)

    def uniform(k, shape, fan_in):
        bound = 1.0 / float(fan_in) ** 0.5
        return jax.random.uniform(k, shape, jnp.float32, -bound, bound)

    # PyTorch-layout parameters, converted to channels-last kernel layout.
    conv1_w_t = uniform(ks[0], (mid_planes, in_planes, 3), in_planes * 3)
    conv1_b_t = uniform(ks[1], (mid_planes,), in_planes * 3)
    conv2_w_t = uniform(ks[2], (mid_planes, mid_planes, 3), mid_planes * 3)
    conv2_b_t = uniform(ks[3], (mid_planes,), mid_planes * 3)
    fc_w_t = uniform(ks[4], (num_classes, mid_planes), mid_planes)
    fc_b_t = uniform(ks[5], (num_classes,), mid_planes)
    ln1_w = 1.0 + 0.1 * jax.random.normal(ks[6], (in_planes,), jnp.float32)
    ln1_b = 0.1 * jax.random.normal(ks[7], (in_planes,), jnp.float32)
    ln2_w = 1.0 + 0.1 * jax.random.normal(ks[8], (mid_planes,), jnp.float32)
    ln2_b = 0.1 * jax.random.normal(ks[9], (mid_planes,), jnp.float32)

    return dict(
        ln1_w=ln1_w.reshape(1, -1), ln1_b=ln1_b.reshape(1, -1),
        ln2_w=ln2_w.reshape(1, -1), ln2_b=ln2_b.reshape(1, -1),
        conv1_w=jnp.transpose(conv1_w_t, (2, 1, 0)),   # (3, Cin, Cmid)
        conv1_b=conv1_b_t.reshape(1, -1),
        conv2_w=jnp.transpose(conv2_w_t, (2, 1, 0)),   # (3, Cmid, Cmid)
        conv2_b=conv2_b_t.reshape(1, -1),
        fc_w=fc_w_t.T,                                 # (Cmid, NC)
        fc_b=fc_b_t.reshape(1, -1),
    )


def reference_forward(x, params):
    # Pure-JAX f32 replica of the PyTorch forward (for correctness checking).
    def ln(h, w, b):
        mu = h.mean(-1, keepdims=True)
        var = ((h - mu) ** 2).mean(-1, keepdims=True)
        return (h - mu) / jnp.sqrt(var + LN_EPS) * w + b

    def conv(h_ncl, w_kio, b_row):
        w_oik = jnp.transpose(w_kio, (2, 1, 0))  # (Cout, Cin, 3)
        y = jax.lax.conv_general_dilated(
            h_ncl, w_oik, window_strides=(1,), padding=((1, 1),),
            dimension_numbers=("NCH", "OIH", "NCH"))
        return y + b_row.reshape(1, -1, 1)

    h = jax.nn.relu(ln(x, params["ln1_w"], params["ln1_b"]))
    h = jnp.transpose(h, (0, 2, 1))                       # (B, Cin, L)
    h = conv(h, params["conv1_w"], params["conv1_b"])     # (B, Cmid, L)
    h = jnp.transpose(h, (0, 2, 1))
    h = jax.nn.relu(ln(h, params["ln2_w"], params["ln2_b"]))
    h = jnp.transpose(h, (0, 2, 1))
    h = conv(h, params["conv2_w"], params["conv2_b"])     # (B, Cmid, L)
    h = h.mean(axis=2)                                    # (B, Cmid)
    return h @ params["fc_w"] + params["fc_b"]


if __name__ == "__main__":
    in_planes, mid_planes, num_classes = 32, 32, 4
    key = jax.random.PRNGKey(0)
    kx, kp, kx2 = jax.random.split(key, 3)
    params = init_params(kp, in_planes, mid_planes, num_classes)

    # Toy size (single grid step, block == whole array).
    B, L = 2, 8
    x = jax.random.normal(kx, (B, L, in_planes), jnp.float32)
    out = jax.block_until_ready(cnn_classifier_forward(x, params))
    ref = reference_forward(x, params)
    assert out.shape == (B, num_classes)
    # Tolerance accounts for bf16 conv-dot operands vs the f32 reference.
    assert jnp.allclose(out, ref, atol=3e-2, rtol=3e-2), (out, ref)

    # Larger batch: exercises the multi-step "parallel" grid path (TB=16).
    B2 = 32
    xb = jax.random.normal(kx2, (B2, L, in_planes), jnp.float32)
    out2 = jax.block_until_ready(cnn_classifier_forward(xb, params))
    ref2 = reference_forward(xb, params)
    assert out2.shape == (B2, num_classes)
    assert jnp.allclose(out2, ref2, atol=3e-2, rtol=3e-2), (out2, ref2)

    print("KERNEL_OK")
</pallas_src>

<mosaic_0001>
module attributes {stable_mosaic.version = 11 : i64} {
  func.func @cnn_classifier_kernel(%arg0: i32, %arg1: memref<16x32xf32, #tpu.memory_space<vmem>>, %arg2: memref<3x32x32xbf16, #tpu.memory_space<vmem>>, %arg3: memref<3x32x32xbf16, #tpu.memory_space<vmem>>, %arg4: memref<32x128xf32, #tpu.memory_space<vmem>>, %arg5: memref<8x128xf32, #tpu.memory_space<vmem>>, %arg6: memref<2x128xf32, #tpu.memory_space<vmem>>) attributes {dimension_semantics = [#tpu.dimension_semantics<parallel>], iteration_bounds = array<i64: 1>, scalar_prefetch = 0 : i64, scratch_operands = 0 : i64, tpu.core_type = #tpu.core_type<tc>, window_params = [{transform_indices = @transform_0, window_bounds = array<i64: 16, 32>}, {pipeline_mode = #tpu.pipeline_mode<synchronous>, transform_indices = @transform_1, window_bounds = array<i64: 3, 32, 32>}, {pipeline_mode = #tpu.pipeline_mode<synchronous>, transform_indices = @transform_2, window_bounds = array<i64: 3, 32, 32>}, {pipeline_mode = #tpu.pipeline_mode<synchronous>, transform_indices = @transform_3, window_bounds = array<i64: 32, 128>}, {pipeline_mode = #tpu.pipeline_mode<synchronous>, transform_indices = @transform_4, window_bounds = array<i64: 8, 128>}, {transform_indices = @transform_5, window_bounds = array<i64: 2, 128>}]} {
    %0 = tpu.iota {dimensions = array<i32: 0>} : vector<16x1xi32>
    %c8_i32 = arith.constant 8 : i32
    %c0_i32 = arith.constant 0 : i32
    %1 = arith.cmpi eq, %c8_i32, %c0_i32 : i32
    %c1_i32 = arith.constant 1 : i32
    %2 = arith.select %1, %c1_i32, %c8_i32 : i32
    %3 = vector.broadcast %2 : i32 to vector<16x1xi32>
    %4 = arith.remsi %0, %3 : vector<16x1xi32>
    %c0_i32_0 = arith.constant 0 : i32
    %5 = vector.broadcast %c0_i32_0 : i32 to vector<16x1xi32>
    %6 = arith.cmpi ne, %4, %5 : vector<16x1xi32>
    %c0_i32_1 = arith.constant 0 : i32
    %7 = vector.broadcast %c0_i32_1 : i32 to vector<16x1xi32>
    %8 = arith.cmpi slt, %4, %7 : vector<16x1xi32>
    %c0_i32_2 = arith.constant 0 : i32
    %9 = arith.cmpi slt, %2, %c0_i32_2 : i32
    %10 = vector.broadcast %9 : i1 to vector<16x1xi1>
    %11 = vector.broadcast %10 : vector<16x1xi1> to vector<16x1xi1>
    %12 = arith.xori %8, %11 : vector<16x1xi1>
    %13 = arith.andi %12, %6 : vector<16x1xi1>
    %14 = vector.broadcast %2 : i32 to vector<16x1xi32>
    %15 = arith.addi %4, %14 : vector<16x1xi32>
    %16 = arith.select %13, %15, %4 : vector<16x1xi1>, vector<16x1xi32>
    %c0_i32_3 = arith.constant 0 : i32
    %17 = vector.broadcast %c0_i32_3 : i32 to vector<16x1xi32>
    %18 = arith.cmpi ne, %16, %17 : vector<16x1xi32>
    %c7_i32 = arith.constant 7 : i32
    %19 = vector.broadcast %c7_i32 : i32 to vector<16x1xi32>
    %20 = arith.cmpi ne, %16, %19 : vector<16x1xi32>
    %c0 = arith.constant 0 : index
    %c0_4 = arith.constant 0 : index
    %21 = vector.load %arg5[%c0, %c0_4] : memref<8x128xf32, #tpu.memory_space<vmem>>, vector<1x32xf32>
    %c1 = arith.constant 1 : index
    %c0_5 = arith.constant 0 : index
    %22 = vector.load %arg5[%c1, %c0_5] : memref<8x128xf32, #tpu.memory_space<vmem>>, vector<1x32xf32>
    %c2 = arith.constant 2 : index
    %c0_6 = arith.constant 0 : index
    %23 = vector.load %arg5[%c2, %c0_6] : memref<8x128xf32, #tpu.memory_space<vmem>>, vector<1x32xf32>
    %c3 = arith.constant 3 : index
    %c0_7 = arith.constant 0 : index
    %24 = vector.load %arg5[%c3, %c0_7] : memref<8x128xf32, #tpu.memory_space<vmem>>, vector<1x32xf32>
    %c4 = arith.constant 4 : index
    %c0_8 = arith.constant 0 : index
    %25 = vector.load %arg5[%c4, %c0_8] : memref<8x128xf32, #tpu.memory_space<vmem>>, vector<1x32xf32>
    %c5 = arith.constant 5 : index
    %c0_9 = arith.constant 0 : index
    %26 = vector.load %arg5[%c5, %c0_9] : memref<8x128xf32, #tpu.memory_space<vmem>>, vector<1x32xf32>
    %c6 = arith.constant 6 : index
    %c0_10 = arith.constant 0 : index
    %27 = vector.load %arg5[%c6, %c0_10] : memref<8x128xf32, #tpu.memory_space<vmem>>, vector<1x128xf32>
    %c0_11 = arith.constant 0 : index
    %c0_12 = arith.constant 0 : index
    %28 = vector.load %arg1[%c0_11, %c0_12] : memref<16x32xf32, #tpu.memory_space<vmem>>, vector<16x32xf32>
    %cst = arith.constant dense<0.000000e+00> : vector<16xf32>
    %29 = vector.multi_reduction <add>, %28, %cst [1] : vector<16x32xf32> to vector<16xf32>
    %30 = vector.shape_cast %29 : vector<16xf32> to vector<16x1xf32>
    %cst_13 = arith.constant 3.200000e+01 : f32
    %31 = vector.broadcast %cst_13 : f32 to vector<16x1xf32>
    %32 = arith.divf %30, %31 : vector<16x1xf32>
    %33 = vector.broadcast %32 : vector<16x1xf32> to vector<16x32xf32>
    %34 = arith.subf %28, %33 : vector<16x32xf32>
    %35 = arith.mulf %34, %34 : vector<16x32xf32>
    %cst_14 = arith.constant dense<0.000000e+00> : vector<16xf32>
    %36 = vector.multi_reduction <add>, %35, %cst_14 [1] : vector<16x32xf32> to vector<16xf32>
    %37 = vector.shape_cast %36 : vector<16xf32> to vector<16x1xf32>
    %cst_15 = arith.constant 3.200000e+01 : f32
    %38 = vector.broadcast %cst_15 : f32 to vector<16x1xf32>
    %39 = arith.divf %37, %38 : vector<16x1xf32>
    %40 = vector.broadcast %32 : vector<16x1xf32> to vector<16x32xf32>
    %41 = arith.subf %28, %40 : vector<16x32xf32>
    %cst_16 = arith.constant 9.99999974E-6 : f32
    %42 = vector.broadcast %cst_16 : f32 to vector<16x1xf32>
    %43 = arith.addf %39, %42 : vector<16x1xf32>
    %44 = math.rsqrt %43 : vector<16x1xf32>
    %45 = vector.broadcast %44 : vector<16x1xf32> to vector<16x32xf32>
    %46 = arith.mulf %41, %45 : vector<16x32xf32>
    %47 = vector.broadcast %21 : vector<1x32xf32> to vector<16x32xf32>
    %48 = arith.mulf %46, %47 : vector<16x32xf32>
    %49 = vector.broadcast %22 : vector<1x32xf32> to vector<16x32xf32>
    %50 = arith.addf %48, %49 : vector<16x32xf32>
    %cst_17 = arith.constant 0.000000e+00 : f32
    %51 = vector.broadcast %cst_17 : f32 to vector<16x32xf32>
    %52 = arith.maximumf %50, %51 : vector<16x32xf32>
    %c1_i32_18 = arith.constant 1 : i32
    %53 = tpu.dynamic_rotate %52 by %c1_i32_18 dim 0 : vector<16x32xf32>, i32 -> vector<16x32xf32>
    %cst_19 = arith.constant 0.000000e+00 : f32
    %54 = vector.shape_cast %18 : vector<16x1xi1> to vector<16x1xi1>
    %55 = vector.broadcast %54 : vector<16x1xi1> to vector<16x32xi1>
    %56 = vector.broadcast %cst_19 : f32 to vector<16x32xf32>
    %57 = arith.select %55, %53, %56 : vector<16x32xi1>, vector<16x32xf32>
    %c15_i32 = arith.constant 15 : i32
    %58 = tpu.dynamic_rotate %52 by %c15_i32 dim 0 : vector<16x32xf32>, i32 -> vector<16x32xf32>
    %cst_20 = arith.constant 0.000000e+00 : f32
    %59 = vector.shape_cast %20 : vector<16x1xi1> to vector<16x1xi1>
    %60 = vector.broadcast %59 : vector<16x1xi1> to vector<16x32xi1>
    %61 = vector.broadcast %cst_20 : f32 to vector<16x32xf32>
    %62 = arith.select %60, %58, %61 : vector<16x32xi1>, vector<16x32xf32>
    %63 = arith.truncf %57 : vector<16x32xf32> to vector<16x32xbf16>
    %c0_21 = arith.constant 0 : index
    %c0_22 = arith.constant 0 : index
    %c0_23 = arith.constant 0 : index
    %64 = vector.load %arg2[%c0_21, %c0_22, %c0_23] : memref<3x32x32xbf16, #tpu.memory_space<vmem>>, vector<1x32x32xbf16>
    %65 = vector.shape_cast %64 : vector<1x32x32xbf16> to vector<32x32xbf16>
    %cst_24 = arith.constant dense<0.000000e+00> : vector<16x32xf32>
    %66 = tpu.matmul %63, %65, %cst_24 {dimension_numbers = #tpu.dot_dimension_numbers<[1], [0], [0], [1], [0, 0, 1, 1], [], []>} : vector<16x32xbf16>, vector<32x32xbf16>, vector<16x32xf32> -> vector<16x32xf32>
    %67 = arith.truncf %52 : vector<16x32xf32> to vector<16x32xbf16>
    %c1_25 = arith.constant 1 : index
    %c0_26 = arith.constant 0 : index
    %c0_27 = arith.constant 0 : index
    %68 = vector.load %arg2[%c1_25, %c0_26, %c0_27] : memref<3x32x32xbf16, #tpu.memory_space<vmem>>, vector<1x32x32xbf16>
    %69 = vector.shape_cast %68 : vector<1x32x32xbf16> to vector<32x32xbf16>
    %cst_28 = arith.constant dense<0.000000e+00> : vector<16x32xf32>
    %70 = tpu.matmul %67, %69, %cst_28 {dimension_numbers = #tpu.dot_dimension_numbers<[1], [0], [0], [1], [0, 0, 1, 1], [], []>} : vector<16x32xbf16>, vector<32x32xbf16>, vector<16x32xf32> -> vector<16x32xf32>
    %71 = arith.addf %66, %70 : vector<16x32xf32>
    %72 = arith.truncf %62 : vector<16x32xf32> to vector<16x32xbf16>
    %c2_29 = arith.constant 2 : index
    %c0_30 = arith.constant 0 : index
    %c0_31 = arith.constant 0 : index
    %73 = vector.load %arg2[%c2_29, %c0_30, %c0_31] : memref<3x32x32xbf16, #tpu.memory_space<vmem>>, vector<1x32x32xbf16>
    %74 = vector.shape_cast %73 : vector<1x32x32xbf16> to vector<32x32xbf16>
    %cst_32 = arith.constant dense<0.000000e+00> : vector<16x32xf32>
    %75 = tpu.matmul %72, %74, %cst_32 {dimension_numbers = #tpu.dot_dimension_numbers<[1], [0], [0], [1], [0, 0, 1, 1], [], []>} : vector<16x32xbf16>, vector<32x32xbf16>, vector<16x32xf32> -> vector<16x32xf32>
    %76 = arith.addf %71, %75 : vector<16x32xf32>
    %77 = vector.broadcast %25 : vector<1x32xf32> to vector<16x32xf32>
    %78 = arith.addf %76, %77 : vector<16x32xf32>
    %cst_33 = arith.constant dense<0.000000e+00> : vector<16xf32>
    %79 = vector.multi_reduction <add>, %78, %cst_33 [1] : vector<16x32xf32> to vector<16xf32>
    %80 = vector.shape_cast %79 : vector<16xf32> to vector<16x1xf32>
    %cst_34 = arith.constant 3.200000e+01 : f32
    %81 = vector.broadcast %cst_34 : f32 to vector<16x1xf32>
    %82 = arith.divf %80, %81 : vector<16x1xf32>
    %83 = vector.broadcast %82 : vector<16x1xf32> to vector<16x32xf32>
    %84 = arith.subf %78, %83 : vector<16x32xf32>
    %85 = arith.mulf %84, %84 : vector<16x32xf32>
    %cst_35 = arith.constant dense<0.000000e+00> : vector<16xf32>
    %86 = vector.multi_reduction <add>, %85, %cst_35 [1] : vector<16x32xf32> to vector<16xf32>
    %87 = vector.shape_cast %86 : vector<16xf32> to vector<16x1xf32>
    %cst_36 = arith.constant 3.200000e+01 : f32
    %88 = vector.broadcast %cst_36 : f32 to vector<16x1xf32>
    %89 = arith.divf %87, %88 : vector<16x1xf32>
    %90 = vector.broadcast %82 : vector<16x1xf32> to vector<16x32xf32>
    %91 = arith.subf %78, %90 : vector<16x32xf32>
    %cst_37 = arith.constant 9.99999974E-6 : f32
    %92 = vector.broadcast %cst_37 : f32 to vector<16x1xf32>
    %93 = arith.addf %89, %92 : vector<16x1xf32>
    %94 = math.rsqrt %93 : vector<16x1xf32>
    %95 = vector.broadcast %94 : vector<16x1xf32> to vector<16x32xf32>
    %96 = arith.mulf %91, %95 : vector<16x32xf32>
    %97 = vector.broadcast %23 : vector<1x32xf32> to vector<16x32xf32>
    %98 = arith.mulf %96, %97 : vector<16x32xf32>
    %99 = vector.broadcast %24 : vector<1x32xf32> to vector<16x32xf32>
    %100 = arith.addf %98, %99 : vector<16x32xf32>
    %cst_38 = arith.constant 0.000000e+00 : f32
    %101 = vector.broadcast %cst_38 : f32 to vector<16x32xf32>
    %102 = arith.maximumf %100, %101 : vector<16x32xf32>
    %c1_i32_39 = arith.constant 1 : i32
    %103 = tpu.dynamic_rotate %102 by %c1_i32_39 dim 0 : vector<16x32xf32>, i32 -> vector<16x32xf32>
    %cst_40 = arith.constant 0.000000e+00 : f32
    %104 = vector.shape_cast %18 : vector<16x1xi1> to vector<16x1xi1>
    %105 = vector.broadcast %104 : vector<16x1xi1> to vector<16x32xi1>
    %106 = vector.broadcast %cst_40 : f32 to vector<16x32xf32>
    %107 = arith.select %105, %103, %106 : vector<16x32xi1>, vector<16x32xf32>
    %c15_i32_41 = arith.constant 15 : i32
    %108 = tpu.dynamic_rotate %102 by %c15_i32_41 dim 0 : vector<16x32xf32>, i32 -> vector<16x32xf32>
    %cst_42 = arith.constant 0.000000e+00 : f32
    %109 = vector.shape_cast %20 : vector<16x1xi1> to vector<16x1xi1>
    %110 = vector.broadcast %109 : vector<16x1xi1> to vector<16x32xi1>
    %111 = vector.broadcast %cst_42 : f32 to vector<16x32xf32>
    %112 = arith.select %110, %108, %111 : vector<16x32xi1>, vector<16x32xf32>
    %113 = arith.truncf %107 : vector<16x32xf32> to vector<16x32xbf16>
    %c0_43 = arith.constant 0 : index
    %c0_44 = arith.constant 0 : index
    %c0_45 = arith.constant 0 : index
    %114 = vector.load %arg3[%c0_43, %c0_44, %c0_45] : memref<3x32x32xbf16, #tpu.memory_space<vmem>>, vector<1x32x32xbf16>
    %115 = vector.shape_cast %114 : vector<1x32x32xbf16> to vector<32x32xbf16>
    %cst_46 = arith.constant dense<0.000000e+00> : vector<16x32xf32>
    %116 = tpu.matmul %113, %115, %cst_46 {dimension_numbers = #tpu.dot_dimension_numbers<[1], [0], [0], [1], [0, 0, 1, 1], [], []>} : vector<16x32xbf16>, vector<32x32xbf16>, vector<16x32xf32> -> vector<16x32xf32>
    %117 = arith.truncf %102 : vector<16x32xf32> to vector<16x32xbf16>
    %c1_47 = arith.constant 1 : index
    %c0_48 = arith.constant 0 : index
    %c0_49 = arith.constant 0 : index
    %118 = vector.load %arg3[%c1_47, %c0_48, %c0_49] : memref<3x32x32xbf16, #tpu.memory_space<vmem>>, vector<1x32x32xbf16>
    %119 = vector.shape_cast %118 : vector<1x32x32xbf16> to vector<32x32xbf16>
    %cst_50 = arith.constant dense<0.000000e+00> : vector<16x32xf32>
    %120 = tpu.matmul %117, %119, %cst_50 {dimension_numbers = #tpu.dot_dimension_numbers<[1], [0], [0], [1], [0, 0, 1, 1], [], []>} : vector<16x32xbf16>, vector<32x32xbf16>, vector<16x32xf32> -> vector<16x32xf32>
    %121 = arith.addf %116, %120 : vector<16x32xf32>
    %122 = arith.truncf %112 : vector<16x32xf32> to vector<16x32xbf16>
    %c2_51 = arith.constant 2 : index
    %c0_52 = arith.constant 0 : index
    %c0_53 = arith.constant 0 : index
    %123 = vector.load %arg3[%c2_51, %c0_52, %c0_53] : memref<3x32x32xbf16, #tpu.memory_space<vmem>>, vector<1x32x32xbf16>
    %124 = vector.shape_cast %123 : vector<1x32x32xbf16> to vector<32x32xbf16>
    %cst_54 = arith.constant dense<0.000000e+00> : vector<16x32xf32>
    %125 = tpu.matmul %122, %124, %cst_54 {dimension_numbers = #tpu.dot_dimension_numbers<[1], [0], [0], [1], [0, 0, 1, 1], [], []>} : vector<16x32xbf16>, vector<32x32xbf16>, vector<16x32xf32> -> vector<16x32xf32>
    %126 = arith.addf %121, %125 : vector<16x32xf32>
    %127 = vector.broadcast %26 : vector<1x32xf32> to vector<16x32xf32>
    %128 = arith.addf %126, %127 : vector<16x32xf32>
    %129 = vector.shape_cast %128 : vector<16x32xf32> to vector<2x8x32xf32>
    %cst_55 = arith.constant dense<0.000000e+00> : vector<2x32xf32>
    %130 = vector.multi_reduction <add>, %129, %cst_55 [1] : vector<2x8x32xf32> to vector<2x32xf32>
    %cst_56 = arith.constant 8.000000e+00 : f32
    %131 = vector.broadcast %cst_56 : f32 to vector<2x32xf32>
    %132 = arith.divf %130, %131 : vector<2x32xf32>
    %c0_57 = arith.constant 0 : index
    %c0_58 = arith.constant 0 : index
    %133 = vector.load %arg4[%c0_57, %c0_58] : memref<32x128xf32, #tpu.memory_space<vmem>>, vector<32x128xf32>
    %cst_59 = arith.constant dense<0.000000e+00> : vector<2x128xf32>
    %134 = tpu.matmul %132, %133, %cst_59 {dimension_numbers = #tpu.dot_dimension_numbers<[1], [0], [0], [1], [0, 0, 1, 1], [], []>} : vector<2x32xf32>, vector<32x128xf32>, vector<2x128xf32> -> vector<2x128xf32>
    %135 = vector.broadcast %27 : vector<1x128xf32> to vector<2x128xf32>
    %136 = arith.addf %134, %135 : vector<2x128xf32>
    %c0_60 = arith.constant 0 : index
    %c0_61 = arith.constant 0 : index
    %137 = vector.load %arg6[%c0_60, %c0_61] : memref<2x128xf32, #tpu.memory_space<vmem>>, vector<2x128xf32>
    tpu.vector_store %arg6[%c0_60, %c0_61], %136 {strides = array<i32>} : memref<2x128xf32, #tpu.memory_space<vmem>>, vector<2x128xf32>,
    return
  }
  func.func @transform_0(%arg0: i32) -> (i32, i32) {
    %c0_i32 = arith.constant 0 : i32
    %c0_i32_0 = arith.constant 0 : i32
    return %arg0, %c0_i32 : i32, i32
  }
  func.func @transform_1(%arg0: i32) -> (i32, i32, i32) {
    %c0_i32 = arith.constant 0 : i32
    %c0_i32_0 = arith.constant 0 : i32
    %c0_i32_1 = arith.constant 0 : i32
    %c0_i32_2 = arith.constant 0 : i32
    return %c0_i32, %c0_i32_0, %c0_i32_1 : i32, i32, i32
  }
  func.func @transform_2(%arg0: i32) -> (i32, i32, i32) {
    %c0_i32 = arith.constant 0 : i32
    %c0_i32_0 = arith.constant 0 : i32
    %c0_i32_1 = arith.constant 0 : i32
    %c0_i32_2 = arith.constant 0 : i32
    return %c0_i32, %c0_i32_0, %c0_i32_1 : i32, i32, i32
  }
  func.func @transform_3(%arg0: i32) -> (i32, i32) {
    %c0_i32 = arith.constant 0 : i32
    %c0_i32_0 = arith.constant 0 : i32
    %c0_i32_1 = arith.constant 0 : i32
    return %c0_i32, %c0_i32_0 : i32, i32
  }
  func.func @transform_4(%arg0: i32) -> (i32, i32) {
    %c0_i32 = arith.constant 0 : i32
    %c0_i32_0 = arith.constant 0 : i32
    %c0_i32_1 = arith.constant 0 : i32
    return %c0_i32, %c0_i32_0 : i32, i32
  }
  func.func @transform_5(%arg0: i32) -> (i32, i32) {
    %c0_i32 = arith.constant 0 : i32
    %c0_i32_0 = arith.constant 0 : i32
    return %arg0, %c0_i32 : i32, i32
  }
}

</mosaic_0001>

<llo_original>
// kernel: cnn_classifier_forward.1
$region0: #{cnn_classifier_forward.1}
  #allocation0 [shape = 'u32[]', space=smem, size = 0x4, offset = 0x4, fixed_abs, tag = 'smem constant byte address 0x4 - core index']
  #allocation1 [shape = 'u32[144,128]{1,0:T(1,128)}', space=vmem, size = 0x12000, scoped, tag = 'internal scratch']
  %s0 = inlined_call_operand.vmem [shape: f32[16,32], index: 0, kind: input, shape index: {}]
  %s1 = inlined_call_operand.vmem [shape: bf16[3,32,32], index: 1, kind: input, shape index: {}]
  %s2 = inlined_call_operand.vmem [shape: bf16[3,32,32], index: 2, kind: input, shape index: {}]
  %s3 = inlined_call_operand.vmem [shape: f32[32,128], index: 3, kind: input, shape index: {}]
  %s4 = inlined_call_operand.vmem [shape: f32[8,128], index: 4, kind: input, shape index: {}]
  %s5 = inlined_call_operand.hbm [shape: f32[2,128], index: 5, kind: output, shape index: {}]
  %s6 = sld [smem:[#allocation0]]
  $region30: #{cnn_classifier_forward.1} parent=0
    _
  %s8 = ssub.s32 1, %s6
  %s9 = scalar_select 0, %s8, %s6
  $region1: #{cnn_classifier_forward.1} parent=0
    #allocation2 [shape = 'u8[1024]{0}', space=vmem, size = 0x400, scoped, tag = 'output window, operand 0, single buffered']
    #allocation3 [shape = 's32[1]{0}', space=sflag, size = 0x4, scoped, tag = 'scoped memory for cnn_classifier_forward.1']
    %10 = vsyncpa [#allocation3], 0
    // Predicated region
    $region2: #{cnn_classifier_forward.1} parent=1 // pred_check
      _
    $region3: #{cnn_classifier_forward.1} parent=1 // pred_check_branch
      %12 = sbr.rel (0) target = $region5
    $region4: #{cnn_classifier_forward.1} parent=1 // pred_region
      _
    $region5: #{cnn_classifier_forward.1} parent=1 // pred_fallthru
      _
    // Predicated region
    $region6: #{cnn_classifier_forward.1} parent=1 // pred_check
      _
    $region7: #{cnn_classifier_forward.1} parent=1 // pred_check_branch
      %14 = sbr.rel (0) target = $region9
    $region8: #{cnn_classifier_forward.1} parent=1 // pred_region
      _
    $region9: #{cnn_classifier_forward.1} parent=1 // pred_fallthru
      _
    // Predicated region
    $region10: #{cnn_classifier_forward.1} parent=1 // pred_check
      _
    $region11: #{cnn_classifier_forward.1} parent=1 // pred_check_branch
      %16 = sbr.rel (0) target = $region13
    $region12: #{cnn_classifier_forward.1} parent=1 // pred_region
      _
    $region13: #{cnn_classifier_forward.1} parent=1 // pred_fallthru
      _
    // Predicated region
    $region14: #{cnn_classifier_forward.1} parent=1 // pred_check
      _
    $region15: #{cnn_classifier_forward.1} parent=1 // pred_check_branch
      %18 = sbr.rel (0) target = $region17
    $region16: #{cnn_classifier_forward.1} parent=1 // pred_region
      _
    $region17: #{cnn_classifier_forward.1} parent=1 // pred_fallthru
      _
    // Predicated region
    $region18: #{cnn_classifier_forward.1} parent=1 // pred_check
      _
    $region19: #{cnn_classifier_forward.1} parent=1 // pred_check_branch
      %20 = sbr.rel (0) target = $region21
    $region20: #{cnn_classifier_forward.1} parent=1 // pred_region
      _
    $region21: #{cnn_classifier_forward.1} parent=1 // pred_fallthru
      _
    %v22 = vlaneseq
    %v23 = vshrl.u32 %v22, 7
    %v24 = vadd.s32 %v23, 8
    %vm25 = vcmp.lt.s32.totalorder %v23, 0
    %v26 = vsub.s32 0, %v23
    %v27 = vsel %vm25, %v26, %v23
    %v28 = vshrl.u32 %v27, 3
    %v29 = vand.u32 %v27, 7
    %v30 = vsub.s32 0, %v29
    %v31 = vsel %vm25, %v30, %v29
    %vm32 = vcmp.lt.s32.totalorder %v24, 0
    %v33 = vsub.s32 0, %v24
    %v34 = vsel %vm32, %v33, %v24
    %v35 = vshrl.u32 %v34, 3
    %v36 = vand.u32 %v34, 7
    %v37 = vsub.s32 0, %v36
    %v38 = vsel %vm32, %v37, %v36
    %vm39 = vcmp.ne.s32.totalorder %v31, 0
    %vm40 = vcmp.ne.s32.totalorder %v38, 0
    %vm41 = vcmp.lt.s32.totalorder %v31, 0
    %vm42 = vcmp.lt.s32.totalorder %v38, 0
    %vm43 = vmand %vm41, %vm39
    %vm44 = vmand %vm42, %vm40
    %v45 = vadd.s32 %v31, 8
    %v46 = vadd.s32 %v38, 8
    %v47 = vsel %vm43, %v45, %v31
    %v48 = vsel %vm44, %v46, %v38
    %vm49 = vcmp.ne.s32.totalorder %v47, 0
    %vm50 = vcmp.ne.s32.totalorder %v48, 0
    %vm51 = vcmp.ne.s32.totalorder %v47, 7
    %vm52 = vcmp.ne.s32.totalorder %v48, 7
    %v53 = vld [vmem:[%s4] sm:$0x1]
    %v54 = vld [vmem:[%s4 + $0x1] sm:$0x1]
    %v55 = vld [vmem:[%s4 + $0x2] sm:$0x1]
    %v56 = vld [vmem:[%s4 + $0x3] sm:$0x1]
    %v57 = vld [vmem:[%s4 + $0x4] sm:$0x1]
    %v58 = vld [vmem:[%s4 + $0x5] sm:$0x1]
    %v59 = vld [vmem:[%s4 + $0x6] sm:$0x1]
    %v60 = vld [vmem:[%s0] sm:$0xff]
    %v61 = vld [vmem:[%s0 + $0x8] sm:$0xff]
    %vm62 = vcmask 261120
    %v63 = vsel %vm62, %v60, 0.0
    %64 = vadd.xlane.f32.xlu0 %v63
    %v65 = vpop.xlane.xlu0 %64
    %v66 = vsel %vm62, %v61, 0.0
    %67 = vadd.xlane.f32.xlu0 %v66
    %v68 = vpop.xlane.xlu0 %67
    %v69 = vrcp.pop 32.0
    %v70 = vmul.f32 %v65, %v69
    %v71 = vmul.f32 %v68, %v69
    %v72 = vsub.f32 %v60, %v70
    %v73 = vsub.f32 %v61, %v71
    %v74 = vmul.f32 %v72, %v72
    %v75 = vmul.f32 %v73, %v73
    %v76 = vsel %vm62, %v74, 0.0
    %77 = vadd.xlane.f32.xlu0 %v76
    %v78 = vpop.xlane.xlu0 %77
    %v79 = vsel %vm62, %v75, 0.0
    %80 = vadd.xlane.f32.xlu0 %v79
    %v81 = vpop.xlane.xlu0 %80
    %v82 = vmul.f32 %v78, %v69
    %v83 = vmul.f32 %v81, %v69
    %v84 = vadd.f32 %v82, 1e-05
    %v85 = vadd.f32 %v83, 1e-05
    %v86 = vrsqrt.pop %v84
    %v87 = vrsqrt.pop %v85
    %v88 = vmul.f32 %v72, %v86
    %v89 = vmul.f32 %v73, %v87
    %v90 = vlaneseq
    %v91 = vshrl.u32 %v90, 7
    %v92 = vsub.s32 0, %v91
    %v93 = vrot.slane %v53, %v92
    %v94 = vmul.f32 %v88, %v93
    %v95 = vmul.f32 %v89, %v93
    %v96 = vlaneseq
    %v97 = vshrl.u32 %v96, 7
    %v98 = vsub.s32 0, %v97
    %v99 = vrot.slane %v54, %v98
    %v100 = vadd.f32 %v94, %v99
    %v101 = vadd.f32 %v95, %v99
    %v102 = vmax.f32 %v100, 0.0
    %v103 = vmax.f32 %v101, 0.0
    %v104 = vrot.slane %v102, 7
    %v105 = vrot.slane %v103, 7
    %vm106 = vcmp.lt.s32.totalorder %v23, 1
    %v107 = vsel %vm106, %v104, %v105
    %v108 = vsel %vm106, %v105, %v104
    %v109 = vsel %vm49, 1, 0
    %v110 = vsel %vm50, 1, 0
    %vm111 = vcmp.eq.s32.totalorder %v109, 1
    %vm112 = vcmp.eq.s32.totalorder %v110, 1
    %v113 = vsel %vm111, %v108, 0.0
    %v114 = vsel %vm112, %v107, 0.0
    %v115 = vrot.slane %v102, 1
    %v116 = vrot.slane %v103, 1
    %vm117 = vcmp.lt.s32.totalorder %v23, 7
    %v118 = vsel %vm117, %v115, %v116
    %v119 = vsel %vm117, %v116, %v115
    %v120 = vsel %vm51, 1, 0
    %v121 = vsel %vm52, 1, 0
    %vm122 = vcmp.eq.s32.totalorder %v120, 1
    %vm123 = vcmp.eq.s32.totalorder %v121, 1
    %v124 = vsel %vm122, %v118, 0.0
    %v125 = vsel %vm123, %v119, 0.0
    %v126 = vpack.c.bf16 %v114, %v113
    %v127 = vld [vmem:[%s1] sm:$0xf]
    %v128 = vld [vmem:[%s1 + $0x4] sm:$0xf]
    %v129 = vld [vmem:[%s1 + $0x8] sm:$0xf]
    %v130 = vld [vmem:[%s1 + $0xc] sm:$0xf]
    %v131 = vpack.c.bf16 %v103, %v102
    %s132 = scalar_lea.vmem %s1, 16
    %v133 = vld [vmem:[%s132] sm:$0xf]
    %v134 = vld [vmem:[%s132 + $0x4] sm:$0xf]
    %v135 = vld [vmem:[%s132 + $0x8] sm:$0xf]
    %v136 = vld [vmem:[%s132 + $0xc] sm:$0xf]
    %v141 = vunpack.c.l.b16 %v133
    %v142 = vunpack.c.l.b16 %v134
    %v143 = vunpack.c.l.b16 %v135
    %v144 = vunpack.c.l.b16 %v136
    %v145 = vpack.c.b16 %v142, %v141
    %v146 = vpack.c.b16 %v144, %v143
    %v150 = vsel %vm62, %v131, 0
    %152 = vmatprep.subr.bf16.mxu0 0
    %153 = vmatpush1.bf16.msra.mxu0 0
    %154 = vmatprep.subr.bf16.mxu0 0
    %155 = vmatpush1.bf16.msra.mxu0 0
    %156 = vmatprep.subr.bf16.mxu0 0
    %157 = vmatpush1.bf16.msra.mxu0 0
    %158 = vmatprep.subr.bf16.mxu0 0
    %159 = vmatpush1.bf16.msra.mxu0 0
    %160 = vmatprep.subr.bf16.mxu0 0
    %161 = vmatpush1.bf16.msra.mxu0 0
    %162 = vmatprep.subr.bf16.mxu0 0
    %163 = vmatpush1.bf16.msra.mxu0 0
    %164 = vmatprep.subr.bf16.mxu0 0
    %165 = vmatpush1.bf16.msra.mxu0 %v146
    %166 = vmatprep.subr.bf16.mxu0 0
    %167 = vmatpush1.bf16.msra.mxu0 %v145
    %168 = vmatprep.subr.bf16.mxu0 0
    %169 = vmatpush2.bf16.msra.mxu0 0
    %170 = vmatprep.subr.bf16.mxu0 0
    %171 = vmatpush2.bf16.msra.mxu0 0
    %172 = vmatprep.subr.bf16.mxu0 0
    %173 = vmatpush2.bf16.msra.mxu0 0
    %174 = vmatprep.subr.bf16.mxu0 0
    %175 = vmatpush2.bf16.msra.mxu0 0
    %176 = vmatprep.subr.bf16.mxu0 0
    %177 = vmatpush2.bf16.msra.mxu0 0
    %178 = vmatprep.subr.bf16.mxu0 0
    %179 = vmatpush2.bf16.msra.mxu0 0
    %180 = vmatprep.subr.bf16.mxu0 0
    %181 = vmatpush2.bf16.msra.mxu0 0
    %182 = vmatprep.subr.bf16.mxu0 0
    %183 = vmatpush2.bf16.msra.mxu0 0
    %184 = vmatprep.mubr.bf16.mxu0 0
    %185 = vmatmul.mubr.bf16.gmra.mxu0 %v150
    %v186 = vpop.f32.mrf.mxu0
    %v187 = vadd.f32 0.0, %v186
    %v188 = vpop.f32.mrf.mxu0
    %v189 = vpop.f32.mrf.mxu0
    %v190 = vadd.f32 0.0, %v189
    %v191 = vpop.f32.mrf.mxu0
    %192 = vdwg.mxu0
    %v197 = vunpack.c.l.b16 %v127
    %v198 = vunpack.c.l.b16 %v128
    %v199 = vunpack.c.l.b16 %v129
    %v200 = vunpack.c.l.b16 %v130
    %v201 = vpack.c.b16 %v198, %v197
    %v202 = vpack.c.b16 %v200, %v199
    %v206 = vsel %vm62, %v126, 0
    %208 = vmatprep.subr.bf16.mxu0 0
    %209 = vmatpush1.bf16.msra.mxu0 0
    %210 = vmatprep.subr.bf16.mxu0 0
    %211 = vmatpush1.bf16.msra.mxu0 0
    %212 = vmatprep.subr.bf16.mxu0 0
    %213 = vmatpush1.bf16.msra.mxu0 0
    %214 = vmatprep.subr.bf16.mxu0 0
    %215 = vmatpush1.bf16.msra.mxu0 0
    %216 = vmatprep.subr.bf16.mxu0 0
    %217 = vmatpush1.bf16.msra.mxu0 0
    %218 = vmatprep.subr.bf16.mxu0 0
    %219 = vmatpush1.bf16.msra.mxu0 0
    %220 = vmatprep.subr.bf16.mxu0 0
    %221 = vmatpush1.bf16.msra.mxu0 %v202
    %222 = vmatprep.subr.bf16.mxu0 0
    %223 = vmatpush1.bf16.msra.mxu0 %v201
    %224 = vmatprep.subr.bf16.mxu0 0
    %225 = vmatpush2.bf16.msra.mxu0 0
    %226 = vmatprep.subr.bf16.mxu0 0
    %227 = vmatpush2.bf16.msra.mxu0 0
    %228 = vmatprep.subr.bf16.mxu0 0
    %229 = vmatpush2.bf16.msra.mxu0 0
    %230 = vmatprep.subr.bf16.mxu0 0
    %231 = vmatpush2.bf16.msra.mxu0 0
    %232 = vmatprep.subr.bf16.mxu0 0
    %233 = vmatpush2.bf16.msra.mxu0 0
    %234 = vmatprep.subr.bf16.mxu0 0
    %235 = vmatpush2.bf16.msra.mxu0 0
    %236 = vmatprep.subr.bf16.mxu0 0
    %237 = vmatpush2.bf16.msra.mxu0 0
    %238 = vmatprep.subr.bf16.mxu0 0
    %239 = vmatpush2.bf16.msra.mxu0 0
    %240 = vmatprep.mubr.bf16.mxu0 0
    %241 = vmatmul.mubr.bf16.gmra.mxu0 %v206
    %v242 = vpop.f32.mrf.mxu0
    %v243 = vadd.f32 %v187, %v242
    %v244 = vpop.f32.mrf.mxu0
    %v245 = vpop.f32.mrf.mxu0
    %v246 = vadd.f32 %v190, %v245
    %v247 = vpop.f32.mrf.mxu0
    %248 = vdwg.mxu0
    %v249 = vpack.c.bf16 %v125, %v124
    %s250 = scalar_lea.vmem %s1, 32
    %v251 = vld [vmem:[%s250] sm:$0xf]
    %v252 = vld [vmem:[%s250 + $0x4] sm:$0xf]
    %v253 = vld [vmem:[%s250 + $0x8] sm:$0xf]
    %v254 = vld [vmem:[%s250 + $0xc] sm:$0xf]
    %v259 = vunpack.c.l.b16 %v251
    %v260 = vunpack.c.l.b16 %v252
    %v261 = vunpack.c.l.b16 %v253
    %v262 = vunpack.c.l.b16 %v254
    %v263 = vpack.c.b16 %v260, %v259
    %v264 = vpack.c.b16 %v262, %v261
    %v268 = vsel %vm62, %v249, 0
    %270 = vmatprep.subr.bf16.mxu0 0
    %271 = vmatpush1.bf16.msra.mxu0 0
    %272 = vmatprep.subr.bf16.mxu0 0
    %273 = vmatpush1.bf16.msra.mxu0 0
    %274 = vmatprep.subr.bf16.mxu0 0
    %275 = vmatpush1.bf16.msra.mxu0 0
    %276 = vmatprep.subr.bf16.mxu0 0
    %277 = vmatpush1.bf16.msra.mxu0 0
    %278 = vmatprep.subr.bf16.mxu0 0
    %279 = vmatpush1.bf16.msra.mxu0 0
    %280 = vmatprep.subr.bf16.mxu0 0
    %281 = vmatpush1.bf16.msra.mxu0 0
    %282 = vmatprep.subr.bf16.mxu0 0
    %283 = vmatpush1.bf16.msra.mxu0 %v264
    %284 = vmatprep.subr.bf16.mxu0 0
    %285 = vmatpush1.bf16.msra.mxu0 %v263
    %286 = vmatprep.subr.bf16.mxu0 0
    %287 = vmatpush2.bf16.msra.mxu0 0
    %288 = vmatprep.subr.bf16.mxu0 0
    %289 = vmatpush2.bf16.msra.mxu0 0
    %290 = vmatprep.subr.bf16.mxu0 0
    %291 = vmatpush2.bf16.msra.mxu0 0
    %292 = vmatprep.subr.bf16.mxu0 0
    %293 = vmatpush2.bf16.msra.mxu0 0
    %294 = vmatprep.subr.bf16.mxu0 0
    %295 = vmatpush2.bf16.msra.mxu0 0
    %296 = vmatprep.subr.bf16.mxu0 0
    %297 = vmatpush2.bf16.msra.mxu0 0
    %298 = vmatprep.subr.bf16.mxu0 0
    %299 = vmatpush2.bf16.msra.mxu0 0
    %300 = vmatprep.subr.bf16.mxu0 0
    %301 = vmatpush2.bf16.msra.mxu0 0
    %302 = vmatprep.mubr.bf16.mxu0 0
    %303 = vmatmul.mubr.bf16.gmra.mxu0 %v268
    %v304 = vpop.f32.mrf.mxu0
    %v305 = vadd.f32 0.0, %v304
    %v306 = vpop.f32.mrf.mxu0
    %v307 = vpop.f32.mrf.mxu0
    %v308 = vadd.f32 0.0, %v307
    %v309 = vpop.f32.mrf.mxu0
    %310 = vdwg.mxu0
    %v311 = vadd.f32 %v243, %v305
    %v312 = vadd.f32 %v246, %v308
    %v313 = vlaneseq
    %v314 = vshrl.u32 %v313, 7
    %v315 = vsub.s32 0, %v314
    %v316 = vrot.slane %v57, %v315
    %v317 = vadd.f32 %v311, %v316
    %v318 = vadd.f32 %v312, %v316
    %v319 = vsel %vm62, %v317, 0.0
    %320 = vadd.xlane.f32.xlu0 %v319
    %v321 = vpop.xlane.xlu0 %320
    %v322 = vsel %vm62, %v318, 0.0
    %323 = vadd.xlane.f32.xlu0 %v322
    %v324 = vpop.xlane.xlu0 %323
    %v325 = vmul.f32 %v321, %v69
    %v326 = vmul.f32 %v324, %v69
    %v327 = vsub.f32 %v317, %v325
    %v328 = vsub.f32 %v318, %v326
    %v329 = vmul.f32 %v327, %v327
    %v330 = vmul.f32 %v328, %v328
    %v331 = vsel %vm62, %v329, 0.0
    %332 = vadd.xlane.f32.xlu0 %v331
    %v333 = vpop.xlane.xlu0 %332
    %v334 = vsel %vm62, %v330, 0.0
    %335 = vadd.xlane.f32.xlu0 %v334
    %v336 = vpop.xlane.xlu0 %335
    %v337 = vmul.f32 %v333, %v69
    %v338 = vmul.f32 %v336, %v69
    %v339 = vadd.f32 %v337, 1e-05
    %v340 = vadd.f32 %v338, 1e-05
    %v341 = vrsqrt.pop %v339
    %v342 = vrsqrt.pop %v340
    %v343 = vmul.f32 %v327, %v341
    %v344 = vmul.f32 %v328, %v342
    %v345 = vlaneseq
    %v346 = vshrl.u32 %v345, 7
    %v347 = vsub.s32 0, %v346
    %v348 = vrot.slane %v55, %v347
    %v349 = vmul.f32 %v343, %v348
    %v350 = vmul.f32 %v344, %v348
    %v351 = vlaneseq
    %v352 = vshrl.u32 %v351, 7
    %v353 = vsub.s32 0, %v352
    %v354 = vrot.slane %v56, %v353
    %v355 = vadd.f32 %v349, %v354
    %v356 = vadd.f32 %v350, %v354
    %v357 = vmax.f32 %v355, 0.0
    %v358 = vmax.f32 %v356, 0.0
    %v359 = vrot.slane %v357, 7
    %v360 = vrot.slane %v358, 7
    %v361 = vsel %vm106, %v359, %v360
    %v362 = vsel %vm106, %v360, %v359
    %v363 = vsel %vm111, %v362, 0.0
    %v364 = vsel %vm112, %v361, 0.0
    %v365 = vrot.slane %v357, 1
    %v366 = vrot.slane %v358, 1
    %v367 = vsel %vm117, %v365, %v366
    %v368 = vsel %vm117, %v366, %v365
    %v369 = vsel %vm122, %v367, 0.0
    %v370 = vsel %vm123, %v368, 0.0
    %v371 = vpack.c.bf16 %v364, %v363
    %v372 = vld [vmem:[%s2] sm:$0xf]
    %v373 = vld [vmem:[%s2 + $0x4] sm:$0xf]
    %v374 = vld [vmem:[%s2 + $0x8] sm:$0xf]
    %v375 = vld [vmem:[%s2 + $0xc] sm:$0xf]
    %v376 = vpack.c.bf16 %v358, %v357
    %s377 = scalar_lea.vmem %s2, 16
    %v378 = vld [vmem:[%s377] sm:$0xf]
    %v379 = vld [vmem:[%s377 + $0x4] sm:$0xf]
    %v380 = vld [vmem:[%s377 + $0x8] sm:$0xf]
    %v381 = vld [vmem:[%s377 + $0xc] sm:$0xf]
    %v386 = vunpack.c.l.b16 %v378
    %v387 = vunpack.c.l.b16 %v379
    %v388 = vunpack.c.l.b16 %v380
    %v389 = vunpack.c.l.b16 %v381
    %v390 = vpack.c.b16 %v387, %v386
    %v391 = vpack.c.b16 %v389, %v388
    %v395 = vsel %vm62, %v376, 0
    %397 = vmatprep.subr.bf16.mxu0 0
    %398 = vmatpush1.bf16.msra.mxu0 0
    %399 = vmatprep.subr.bf16.mxu0 0
    %400 = vmatpush1.bf16.msra.mxu0 0
    %401 = vmatprep.subr.bf16.mxu0 0
    %402 = vmatpush1.bf16.msra.mxu0 0
    %403 = vmatprep.subr.bf16.mxu0 0
    %404 = vmatpush1.bf16.msra.mxu0 0
    %405 = vmatprep.subr.bf16.mxu0 0
    %406 = vmatpush1.bf16.msra.mxu0 0
    %407 = vmatprep.subr.bf16.mxu0 0
    %408 = vmatpush1.bf16.msra.mxu0 0
    %409 = vmatprep.subr.bf16.mxu0 0
    %410 = vmatpush1.bf16.msra.mxu0 %v391
    %411 = vmatprep.subr.bf16.mxu0 0
    %412 = vmatpush1.bf16.msra.mxu0 %v390
    %413 = vmatprep.subr.bf16.mxu0 0
    %414 = vmatpush2.bf16.msra.mxu0 0
    %415 = vmatprep.subr.bf16.mxu0 0
    %416 = vmatpush2.bf16.msra.mxu0 0
    %417 = vmatprep.subr.bf16.mxu0 0
    %418 = vmatpush2.bf16.msra.mxu0 0
    %419 = vmatprep.subr.bf16.mxu0 0
    %420 = vmatpush2.bf16.msra.mxu0 0
    %421 = vmatprep.subr.bf16.mxu0 0
    %422 = vmatpush2.bf16.msra.mxu0 0
    %423 = vmatprep.subr.bf16.mxu0 0
    %424 = vmatpush2.bf16.msra.mxu0 0
    %425 = vmatprep.subr.bf16.mxu0 0
    %426 = vmatpush2.bf16.msra.mxu0 0
    %427 = vmatprep.subr.bf16.mxu0 0
    %428 = vmatpush2.bf16.msra.mxu0 0
    %429 = vmatprep.mubr.bf16.mxu0 0
    %430 = vmatmul.mubr.bf16.gmra.mxu0 %v395
    %v431 = vpop.f32.mrf.mxu0
    %v432 = vadd.f32 0.0, %v431
    %v433 = vpop.f32.mrf.mxu0
    %v434 = vpop.f32.mrf.mxu0
    %v435 = vadd.f32 0.0, %v434
    %v436 = vpop.f32.mrf.mxu0
    %437 = vdwg.mxu0
    %v442 = vunpack.c.l.b16 %v372
    %v443 = vunpack.c.l.b16 %v373
    %v444 = vunpack.c.l.b16 %v374
    %v445 = vunpack.c.l.b16 %v375
    %v446 = vpack.c.b16 %v443, %v442
    %v447 = vpack.c.b16 %v445, %v444
    %v451 = vsel %vm62, %v371, 0
    %453 = vmatprep.subr.bf16.mxu0 0
    %454 = vmatpush1.bf16.msra.mxu0 0
    %455 = vmatprep.subr.bf16.mxu0 0
    %456 = vmatpush1.bf16.msra.mxu0 0
    %457 = vmatprep.subr.bf16.mxu0 0
    %458 = vmatpush1.bf16.msra.mxu0 0
    %459 = vmatprep.subr.bf16.mxu0 0
    %460 = vmatpush1.bf16.msra.mxu0 0
    %461 = vmatprep.subr.bf16.mxu0 0
    %462 = vmatpush1.bf16.msra.mxu0 0
    %463 = vmatprep.subr.bf16.mxu0 0
    %464 = vmatpush1.bf16.msra.mxu0 0
    %465 = vmatprep.subr.bf16.mxu0 0
    %466 = vmatpush1.bf16.msra.mxu0 %v447
    %467 = vmatprep.subr.bf16.mxu0 0
    %468 = vmatpush1.bf16.msra.mxu0 %v446
    %469 = vmatprep.subr.bf16.mxu0 0
    %470 = vmatpush2.bf16.msra.mxu0 0
    %471 = vmatprep.subr.bf16.mxu0 0
    %472 = vmatpush2.bf16.msra.mxu0 0
    %473 = vmatprep.subr.bf16.mxu0 0
    %474 = vmatpush2.bf16.msra.mxu0 0
    %475 = vmatprep.subr.bf16.mxu0 0
    %476 = vmatpush2.bf16.msra.mxu0 0
    %477 = vmatprep.subr.bf16.mxu0 0
    %478 = vmatpush2.bf16.msra.mxu0 0
    %479 = vmatprep.subr.bf16.mxu0 0
    %480 = vmatpush2.bf16.msra.mxu0 0
    %481 = vmatprep.subr.bf16.mxu0 0
    %482 = vmatpush2.bf16.msra.mxu0 0
    %483 = vmatprep.subr.bf16.mxu0 0
    %484 = vmatpush2.bf16.msra.mxu0 0
    %485 = vmatprep.mubr.bf16.mxu0 0
    %486 = vmatmul.mubr.bf16.gmra.mxu0 %v451
    %v487 = vpop.f32.mrf.mxu0
    %v488 = vadd.f32 %v432, %v487
    %v489 = vpop.f32.mrf.mxu0
    %v490 = vpop.f32.mrf.mxu0
    %v491 = vadd.f32 %v435, %v490
    %v492 = vpop.f32.mrf.mxu0
    %493 = vdwg.mxu0
    %v494 = vpack.c.bf16 %v370, %v369
    %s495 = scalar_lea.vmem %s2, 32
    %v496 = vld [vmem:[%s495] sm:$0xf]
    %v497 = vld [vmem:[%s495 + $0x4] sm:$0xf]
    %v498 = vld [vmem:[%s495 + $0x8] sm:$0xf]
    %v499 = vld [vmem:[%s495 + $0xc] sm:$0xf]
    %v504 = vunpack.c.l.b16 %v496
    %v505 = vunpack.c.l.b16 %v497
    %v506 = vunpack.c.l.b16 %v498
    %v507 = vunpack.c.l.b16 %v499
    %v508 = vpack.c.b16 %v505, %v504
    %v509 = vpack.c.b16 %v507, %v506
    %v513 = vsel %vm62, %v494, 0
    %515 = vmatprep.subr.bf16.mxu0 0
    %516 = vmatpush1.bf16.msra.mxu0 0
    %517 = vmatprep.subr.bf16.mxu0 0
    %518 = vmatpush1.bf16.msra.mxu0 0
    %519 = vmatprep.subr.bf16.mxu0 0
    %520 = vmatpush1.bf16.msra.mxu0 0
    %521 = vmatprep.subr.bf16.mxu0 0
    %522 = vmatpush1.bf16.msra.mxu0 0
    %523 = vmatprep.subr.bf16.mxu0 0
    %524 = vmatpush1.bf16.msra.mxu0 0
    %525 = vmatprep.subr.bf16.mxu0 0
    %526 = vmatpush1.bf16.msra.mxu0 0
    %527 = vmatprep.subr.bf16.mxu0 0
    %528 = vmatpush1.bf16.msra.mxu0 %v509
    %529 = vmatprep.subr.bf16.mxu0 0
    %530 = vmatpush1.bf16.msra.mxu0 %v508
    %531 = vmatprep.subr.bf16.mxu0 0
    %532 = vmatpush2.bf16.msra.mxu0 0
    %533 = vmatprep.subr.bf16.mxu0 0
    %534 = vmatpush2.bf16.msra.mxu0 0
    %535 = vmatprep.subr.bf16.mxu0 0
    %536 = vmatpush2.bf16.msra.mxu0 0
    %537 = vmatprep.subr.bf16.mxu0 0
    %538 = vmatpush2.bf16.msra.mxu0 0
    %539 = vmatprep.subr.bf16.mxu0 0
    %540 = vmatpush2.bf16.msra.mxu0 0
    %541 = vmatprep.subr.bf16.mxu0 0
    %542 = vmatpush2.bf16.msra.mxu0 0
    %543 = vmatprep.subr.bf16.mxu0 0
    %544 = vmatpush2.bf16.msra.mxu0 0
    %545 = vmatprep.subr.bf16.mxu0 0
    %546 = vmatpush2.bf16.msra.mxu0 0
    %547 = vmatprep.mubr.bf16.mxu0 0
    %548 = vmatmul.mubr.bf16.gmra.mxu0 %v513
    %v549 = vpop.f32.mrf.mxu0
    %v550 = vadd.f32 0.0, %v549
    %v551 = vpop.f32.mrf.mxu0
    %v552 = vpop.f32.mrf.mxu0
    %v553 = vadd.f32 0.0, %v552
    %v554 = vpop.f32.mrf.mxu0
    %555 = vdwg.mxu0
    %v556 = vadd.f32 %v488, %v550
    %v557 = vadd.f32 %v491, %v553
    %v558 = vlaneseq
    %v559 = vshrl.u32 %v558, 7
    %v560 = vsub.s32 0, %v559
    %v561 = vrot.slane %v58, %v560
    %v562 = vadd.f32 %v556, %v561
    %v563 = vadd.f32 %v557, %v561
    %v564 = vsel %vm62, %v562, 0.0
    %v565 = vrot.slane %v564, 4
    %v566 = vadd.f32 %v564, %v565
    %v567 = vrot.slane %v566, 2
    %v568 = vadd.f32 %v566, %v567
    %v569 = vrot.slane %v568, 1
    %v570 = vadd.f32 %v568, %v569
    %v571 = vsel %vm62, %v563, 0.0
    %v572 = vrot.slane %v571, 4
    %v573 = vadd.f32 %v571, %v572
    %v574 = vrot.slane %v573, 2
    %v575 = vadd.f32 %v573, %v574
    %v576 = vrot.slane %v575, 1
    %v577 = vadd.f32 %v575, %v576
    %v578 = vrcp.pop 8.0
    %v579 = vmul.f32 %v570, %v578
    %v580 = vmul.f32 %v577, %v578
    %v581 = vld [vmem:[%s3] sm:$0xff]
    %v582 = vld [vmem:[%s3 + $0x8] sm:$0xff]
    %v583 = vld [vmem:[%s3 + $0x10] sm:$0xff]
    %v584 = vld [vmem:[%s3 + $0x18] sm:$0xff]
    %v585 = vlaneseq
    %v586 = vshrl.u32 %v585, 7
    %v587 = vsub.s32 0, %v586
    %v588 = vrot.slane %v59, %v587
    %vm591 = vcmask 1041409
    %v592 = vsel %vm591, %v580, %v579
    %v593 = vsel %vm62, %v592, 0
    %595 = vmatprep.subr.mxu0 0.0
    %596 = vmatpush1.msra.mxu0 0.0
    %597 = vmatprep.subr.mxu0 0.0
    %598 = vmatpush1.msra.mxu0 0.0
    %599 = vmatprep.subr.mxu0 0.0
    %600 = vmatpush1.msra.mxu0 0.0
    %601 = vmatprep.subr.mxu0 0.0
    %602 = vmatpush1.msra.mxu0 0.0
    %603 = vmatprep.subr.mxu0 0.0
    %604 = vmatpush1.msra.mxu0 0.0
    %605 = vmatprep.subr.mxu0 0.0
    %606 = vmatpush1.msra.mxu0 0.0
    %607 = vmatprep.subr.mxu0 0.0
    %608 = vmatpush1.msra.mxu0 0.0
    %609 = vmatprep.subr.mxu0 0.0
    %610 = vmatpush1.msra.mxu0 0.0
    %611 = vmatprep.subr.mxu0 0.0
    %612 = vmatpush1.msra.mxu0 0.0
    %613 = vmatprep.subr.mxu0 0.0
    %614 = vmatpush1.msra.mxu0 0.0
    %615 = vmatprep.subr.mxu0 0.0
    %616 = vmatpush1.msra.mxu0 0.0
    %617 = vmatprep.subr.mxu0 0.0
    %618 = vmatpush1.msra.mxu0 0.0
    %619 = vmatprep.subr.mxu0 0.0
    %620 = vmatpush1.msra.mxu0 %v584
    %621 = vmatprep.subr.mxu0 0.0
    %622 = vmatpush1.msra.mxu0 %v583
    %623 = vmatprep.subr.mxu0 0.0
    %624 = vmatpush1.msra.mxu0 %v582
    %625 = vmatprep.subr.mxu0 0.0
    %626 = vmatpush1.msra.mxu0 %v581
    %627 = vmatprep.subr.mxu0 0.0
    %628 = vmatpush2.msra.mxu0 0.0
    %629 = vmatprep.subr.mxu0 0.0
    %630 = vmatpush2.msra.mxu0 0.0
    %631 = vmatprep.subr.mxu0 0.0
    %632 = vmatpush2.msra.mxu0 0.0
    %633 = vmatprep.subr.mxu0 0.0
    %634 = vmatpush2.msra.mxu0 0.0
    %635 = vmatprep.subr.mxu0 0.0
    %636 = vmatpush2.msra.mxu0 0.0
    %637 = vmatprep.subr.mxu0 0.0
    %638 = vmatpush2.msra.mxu0 0.0
    %639 = vmatprep.subr.mxu0 0.0
    %640 = vmatpush2.msra.mxu0 0.0
    %641 = vmatprep.subr.mxu0 0.0
    %642 = vmatpush2.msra.mxu0 0.0
    %643 = vmatprep.subr.mxu0 0.0
    %644 = vmatpush2.msra.mxu0 0.0
    %645 = vmatprep.subr.mxu0 0.0
    %646 = vmatpush2.msra.mxu0 0.0
    %647 = vmatprep.subr.mxu0 0.0
    %648 = vmatpush2.msra.mxu0 0.0
    %649 = vmatprep.subr.mxu0 0.0
    %650 = vmatpush2.msra.mxu0 0.0
    %651 = vmatprep.subr.mxu0 0.0
    %652 = vmatpush2.msra.mxu0 0.0
    %653 = vmatprep.subr.mxu0 0.0
    %654 = vmatpush2.msra.mxu0 0.0
    %655 = vmatprep.subr.mxu0 0.0
    %656 = vmatpush2.msra.mxu0 0.0
    %657 = vmatprep.subr.mxu0 0.0
    %658 = vmatpush2.msra.mxu0 0.0
    %659 = vmatprep.mubr.f32.mxu0 0.0
    %660 = vmatmul.mubr.f32.gmra.mxu0 %v593
    %v661 = vpop.f32.mrf.mxu0
    %v662 = vadd.f32 %v588, %v661
    %v663 = vpop.f32.mrf.mxu0
    %664 = vdwg.mxu0
    %665 = vst [vmem:[#allocation2] sm:$0x3] %v662
    // Predicated region
    $region22: #{cnn_classifier_forward.1} parent=1 // pred_check
      _
    $region23: #{cnn_classifier_forward.1} parent=1 // pred_check_branch
      %667 = sbr.rel (0) target = $region25
    $region24: #{cnn_classifier_forward.1} parent=1 // pred_region
      %s669 = ssub.s32 32, 32
      %670 = vsyncadd [#allocation3], %s669
      %s672 = sshll.u32 [#allocation2], 4
      %s673 = int_to_ptr.vmem [resolvable:$true] %s672
      %675 = dma.vmem_to_hbm [thread:$0]  %s673, 32, %s5, [#allocation3]
    $region25: #{cnn_classifier_forward.1} parent=1 // pred_fallthru
      _
    // Predicated region
    $region26: #{cnn_classifier_forward.1} parent=1 // pred_check
      _
    $region27: #{cnn_classifier_forward.1} parent=1 // pred_check_branch
      %677 = sbr.rel (0) target = $region29
    $region28: #{cnn_classifier_forward.1} parent=1 // pred_region
      %678 = dma.done [#allocation3], 32
    $region29: #{cnn_classifier_forward.1} parent=1 // pred_fallthru
      _
    %679 = vsyncpa [#allocation3], 1

</llo_original>
